<compile_context>
chip_gen: v7x
topology: tpu7x:2x2x1
jax: 0.10.0
libtpu: 0.0.40
codegen_flags: <defaults>
</compile_context>

<pallas_src>
import functools

import jax
import jax.numpy as jnp
from jax.experimental import pallas as pl
from jax.experimental.pallas import tpu as pltpu


def _round_up(x: int, m: int) -> int:
    return ((x + m - 1) // m) * m


# --------------------------------------------------------------------------------------
# Linear (matmul + bias) kernel: used for the fused QKV projection and the output proj.
# --------------------------------------------------------------------------------------
def _linear_kernel(x_ref, w_ref, b_ref, o_ref):
    # x_ref: (tm, in_f)   w_ref: (in_f, out_f)   b_ref: (1, out_f)   o_ref: (tm, out_f)
    # Feed operands to the MXU in their native dtype; accumulate in f32.
    y = jnp.dot(x_ref[...], w_ref[...], preferred_element_type=jnp.float32)
    y = y + b_ref[...].astype(jnp.float32)          # broadcast (1, out_f) over rows
    o_ref[...] = y.astype(o_ref.dtype)


def linear_pallas(x2d, w, b, *, tm=256):
    """x2d: (rows, in_f), w: (in_f, out_f), b: (out_f,). Returns (rows, out_f)."""
    rows, in_f = x2d.shape
    out_f = w.shape[1]

    # Large MXU-shaped row tile; clamp + pad so any row count works (no hard assert).
    tm = min(tm, _round_up(rows, 8))
    padded = _round_up(rows, tm)
    if padded != rows:
        x2d = jnp.pad(x2d, ((0, padded - rows), (0, 0)))
    grid = (padded // tm,)
    b2d = b.reshape(1, out_f)

    # TODO(synk): for very large in_f/out_f, add a K/N-chunked grid axis + accumulator
    # and an explicit vmem_limit_bytes so resident weights fit the 64 MiB VMEM of v7x.
    out = pl.pallas_call(
        _linear_kernel,
        out_shape=jax.ShapeDtypeStruct((padded, out_f), x2d.dtype),
        grid_spec=pltpu.PrefetchScalarGridSpec(
            num_scalar_prefetch=0,
            grid=grid,
            in_specs=[
                pl.BlockSpec((tm, in_f), lambda i: (i, 0)),         # x tile (pipelined)
                pl.BlockSpec((in_f, out_f), lambda i: (0, 0)),      # weights (resident)
                pl.BlockSpec((1, out_f), lambda i: (0, 0)),         # bias (resident)
            ],
            out_specs=pl.BlockSpec((tm, out_f), lambda i: (i, 0)),
        ),
        compiler_params=pltpu.CompilerParams(dimension_semantics=("parallel",)),
    )(x2d, w, b2d)

    if padded != rows:
        out = out[:rows]
    return out


# --------------------------------------------------------------------------------------
# Per-frame attention kernel: softmax(q k^T * scale) v + q (residual_pool=True).
# Several independent (batch, head, frame) problems are batched per grid step.
# --------------------------------------------------------------------------------------
def _frame_attention_kernel(q_ref, k_ref, v_ref, o_ref, *, scale):
    # q_ref/k_ref/v_ref/o_ref: (fb, S, Dh) — fb independent frames per step.
    q = q_ref[...]
    s = jnp.einsum("fqd,fkd->fqk", q, k_ref[...],
                   preferred_element_type=jnp.float32) * scale          # (fb, S, S) f32
    m = jnp.max(s, axis=-1, keepdims=True)
    e = jnp.exp(s - m)                                                   # unnormalized
    denom = jnp.sum(e, axis=-1, keepdims=True)
    o = jnp.einsum("fqk,fkd->fqd", e.astype(v_ref.dtype), v_ref[...],
                   preferred_element_type=jnp.float32)                   # (fb, S, Dh)
    o = o / denom + q.astype(jnp.float32)                                # residual pool
    o_ref[...] = o.astype(o_ref.dtype)


def _choose_frames_per_block(G, S, bytes_budget=4 * 1024 * 1024):
    """Largest divisor of G whose f32 score block (fb, S, S) stays under the budget."""
    max_fb = max(1, bytes_budget // (S * S * 4))
    fb = 1
    for cand in range(1, min(G, max_fb) + 1):
        if G % cand == 0:
            fb = cand
    return fb


def frame_attention_pallas(qf, kf, vf, *, scale, frames_per_block=None):
    """qf/kf/vf: (G, S, Dh) with G = B * num_heads * T. Returns (G, S, Dh)."""
    G, S, Dh = qf.shape
    fb = frames_per_block or _choose_frames_per_block(G, S)
    assert G % fb == 0
    grid = (G // fb,)

    kern = functools.partial(_frame_attention_kernel, scale=scale)
    return pl.pallas_call(
        kern,
        out_shape=jax.ShapeDtypeStruct((G, S, Dh), qf.dtype),
        grid_spec=pltpu.PrefetchScalarGridSpec(
            num_scalar_prefetch=0,
            grid=grid,
            in_specs=[
                pl.BlockSpec((fb, S, Dh), lambda i: (i, 0, 0)),
                pl.BlockSpec((fb, S, Dh), lambda i: (i, 0, 0)),
                pl.BlockSpec((fb, S, Dh), lambda i: (i, 0, 0)),
            ],
            out_specs=pl.BlockSpec((fb, S, Dh), lambda i: (i, 0, 0)),
        ),
        compiler_params=pltpu.CompilerParams(dimension_semantics=("parallel",)),
    )(qf, kf, vf)


# --------------------------------------------------------------------------------------
# Full MultiScaleAttention forward (default config).
# --------------------------------------------------------------------------------------
def multiscale_attention_pallas(x, wq, wk, wv, w_proj, b_proj, thw_shape, num_heads):
    """x: (B, N, C) with N = T*H*W + 1 (cls token first). Returns (out, q_shape)."""
    B, N, C = x.shape
    T, H, W = thw_shape
    assert N == T * H * W + 1, "has_cls_embed=True requires N == prod(thw) + 1"
    head_dim = C // num_heads
    scale = head_dim ** (-0.5)

    # --- QKV projection (qkv_bias=False): one fused matmul over concatenated weights.
    w_qkv = jnp.concatenate([wq, wk, wv], axis=1)                     # (C, 3C)
    zero_b = jnp.zeros((3 * C,), dtype=x.dtype)                       # no qkv bias
    qkv = linear_pallas(x.reshape(B * N, C), w_qkv, zero_b)           # (B*N, 3C)
    qkv = qkv.reshape(B, N, 3, num_heads, head_dim)
    qkv = jnp.transpose(qkv, (2, 0, 3, 1, 4))                         # (3, B, h, N, Dh)
    q, k, v = qkv[0], qkv[1], qkv[2]

    # TODO(synk): conv3d pooling + LayerNorm of q/k/v is disabled for the default
    # kernel/stride of (1,1,1) (pool_q/pool_k/pool_v are None) and is not implemented.

    # --- Build per-frame sequences: cls token replicated to every time frame.
    def to_frames(t):
        cls_tok = t[:, :, :1, :]                                       # (B, h, 1, Dh)
        rest = t[:, :, 1:, :].reshape(B, num_heads, T, H * W, head_dim)
        cls_rep = jnp.broadcast_to(cls_tok[:, :, None, :, :],
                                   (B, num_heads, T, 1, head_dim))
        fr = jnp.concatenate([cls_rep, rest], axis=3)                  # (B, h, T, S, Dh)
        return fr.reshape(B * num_heads * T, H * W + 1, head_dim)

    qf, kf, vf = to_frames(q), to_frames(k), to_frames(v)
    of = frame_attention_pallas(qf, kf, vf, scale=scale)               # (G, S, Dh)

    # --- Re-assemble tokens: cls averaged over frames, spatial tokens flattened.
    of = of.reshape(B, num_heads, T, H * W + 1, head_dim)
    cls_o = jnp.mean(of[:, :, :, :1, :], axis=2)                       # (B, h, 1, Dh)
    rest_o = of[:, :, :, 1:, :].reshape(B, num_heads, T * H * W, head_dim)
    xo = jnp.concatenate([cls_o, rest_o], axis=2)                      # (B, h, N, Dh)
    xo = jnp.transpose(xo, (0, 2, 1, 3)).reshape(B, N, C)

    # --- Output projection (bias_on=True). dropout_rate=0.0 -> proj_drop is a no-op.
    out = linear_pallas(xo.reshape(B * N, C), w_proj, b_proj).reshape(B, N, C)
    return out, (T, H, W)


# --------------------------------------------------------------------------------------
# Pure-JAX reference (mirrors the PyTorch forward with the default config).
# --------------------------------------------------------------------------------------
def _reference_msa(x, wq, wk, wv, w_proj, b_proj, thw_shape, num_heads):
    B, N, C = x.shape
    T, H, W = thw_shape
    Dh = C // num_heads
    scale = Dh ** (-0.5)
    hp = jax.lax.Precision.HIGHEST

    def proj(t, w):
        return jnp.einsum("bnc,cd->bnd", t, w, precision=hp)

    q = proj(x, wq).reshape(B, N, num_heads, Dh).transpose(0, 2, 1, 3)
    k = proj(x, wk).reshape(B, N, num_heads, Dh).transpose(0, 2, 1, 3)
    v = proj(x, wv).reshape(B, N, num_heads, Dh).transpose(0, 2, 1, 3)

    def frames(t):
        cls_tok, rest = t[:, :, :1, :], t[:, :, 1:, :]
        rest = rest.reshape(B, num_heads, T, H * W, Dh)
        cls_rep = jnp.repeat(cls_tok[:, :, None, :, :], T, axis=2)
        return jnp.concatenate([cls_rep, rest], axis=3)

    qf, kf, vf = frames(q), frames(k), frames(v)
    attn = jnp.einsum("bhtqd,bhtkd->bhtqk", qf, kf, precision=hp) * scale
    attn = jax.nn.softmax(attn, axis=-1)
    o = jnp.einsum("bhtqk,bhtkd->bhtqd", attn, vf, precision=hp) + qf
    cls_o = o[:, :, :, :1, :].mean(axis=2)
    rest_o = o[:, :, :, 1:, :].reshape(B, num_heads, T * H * W, Dh)
    xo = jnp.concatenate([cls_o, rest_o], axis=2)
    xo = xo.transpose(0, 2, 1, 3).reshape(B, N, C)
    return jnp.einsum("bnc,cd->bnd", xo, w_proj, precision=hp) + b_proj


if __name__ == "__main__":
    key = jax.random.PRNGKey(0)
    B = 2
    num_heads = 8
    dim = 128                      # lane-dense channel dim (multiple of 128)
    thw = (2, 4, 4)                # (T, H, W)
    N = thw[0] * thw[1] * thw[2] + 1   # +1 cls token

    k_x, k_q, k_k, k_v, k_p, k_b = jax.random.split(key, 6)
    x = jax.random.normal(k_x, (B, N, dim), dtype=jnp.float32)
    lim = 1.0 / jnp.sqrt(dim)
    wq = jax.random.uniform(k_q, (dim, dim), jnp.float32, -lim, lim)
    wk = jax.random.uniform(k_k, (dim, dim), jnp.float32, -lim, lim)
    wv = jax.random.uniform(k_v, (dim, dim), jnp.float32, -lim, lim)
    w_proj = jax.random.uniform(k_p, (dim, dim), jnp.float32, -lim, lim)
    b_proj = jax.random.uniform(k_b, (dim,), jnp.float32, -lim, lim)

    out, q_shape = multiscale_attention_pallas(
        x, wq, wk, wv, w_proj, b_proj, thw, num_heads)
    out = jax.block_until_ready(out)

    ref = _reference_msa(x, wq, wk, wv, w_proj, b_proj, thw, num_heads)
    assert out.shape == (B, N, dim)
    assert tuple(q_shape) == thw
    assert jnp.allclose(out, ref, atol=1e-3, rtol=1e-3), "mismatch vs reference"

    print("KERNEL_OK")
</pallas_src>

<mosaic_0001>
module attributes {stable_mosaic.version = 11 : i64} {
  func.func @_linear_kernel(%arg0: i32, %arg1: memref<72x128xf32, #tpu.memory_space<vmem>>, %arg2: memref<128x384xf32, #tpu.memory_space<vmem>>, %arg3: memref<1x384xf32, #tpu.memory_space<vmem>>, %arg4: memref<72x384xf32, #tpu.memory_space<vmem>>) attributes {dimension_semantics = [#tpu.dimension_semantics<parallel>], iteration_bounds = array<i64: 1>, scalar_prefetch = 0 : i64, scratch_operands = 0 : i64, tpu.core_type = #tpu.core_type<tc>, window_params = [{transform_indices = @transform_0, window_bounds = array<i64: 72, 128>}, {pipeline_mode = #tpu.pipeline_mode<synchronous>, transform_indices = @transform_1, window_bounds = array<i64: 128, 384>}, {pipeline_mode = #tpu.pipeline_mode<synchronous>, transform_indices = @transform_2, window_bounds = array<i64: 1, 384>}, {transform_indices = @transform_3, window_bounds = array<i64: 72, 384>}]} {
    %c0 = arith.constant 0 : index
    %c0_0 = arith.constant 0 : index
    %0 = vector.load %arg1[%c0, %c0_0] : memref<72x128xf32, #tpu.memory_space<vmem>>, vector<72x128xf32>
    %c0_1 = arith.constant 0 : index
    %c0_2 = arith.constant 0 : index
    %1 = vector.load %arg2[%c0_1, %c0_2] : memref<128x384xf32, #tpu.memory_space<vmem>>, vector<128x384xf32>
    %cst = arith.constant dense<0.000000e+00> : vector<72x384xf32>
    %2 = tpu.matmul %0, %1, %cst {dimension_numbers = #tpu.dot_dimension_numbers<[1], [0], [0], [1], [0, 0, 1, 1], [], []>} : vector<72x128xf32>, vector<128x384xf32>, vector<72x384xf32> -> vector<72x384xf32>
    %c0_3 = arith.constant 0 : index
    %c0_4 = arith.constant 0 : index
    %3 = vector.load %arg3[%c0_3, %c0_4] : memref<1x384xf32, #tpu.memory_space<vmem>>, vector<1x384xf32>
    %4 = vector.broadcast %3 : vector<1x384xf32> to vector<72x384xf32>
    %5 = arith.addf %2, %4 : vector<72x384xf32>
    %c0_5 = arith.constant 0 : index
    %c0_6 = arith.constant 0 : index
    %6 = vector.load %arg4[%c0_5, %c0_6] : memref<72x384xf32, #tpu.memory_space<vmem>>, vector<72x384xf32>
    tpu.vector_store %arg4[%c0_5, %c0_6], %5 {strides = array<i32>} : memref<72x384xf32, #tpu.memory_space<vmem>>, vector<72x384xf32>,
    return
  }
  func.func @transform_0(%arg0: i32) -> (i32, i32) {
    %c0_i32 = arith.constant 0 : i32
    %c0_i32_0 = arith.constant 0 : i32
    return %arg0, %c0_i32 : i32, i32
  }
  func.func @transform_1(%arg0: i32) -> (i32, i32) {
    %c0_i32 = arith.constant 0 : i32
    %c0_i32_0 = arith.constant 0 : i32
    %c0_i32_1 = arith.constant 0 : i32
    return %c0_i32, %c0_i32_0 : i32, i32
  }
  func.func @transform_2(%arg0: i32) -> (i32, i32) {
    %c0_i32 = arith.constant 0 : i32
    %c0_i32_0 = arith.constant 0 : i32
    %c0_i32_1 = arith.constant 0 : i32
    return %c0_i32, %c0_i32_0 : i32, i32
  }
  func.func @transform_3(%arg0: i32) -> (i32, i32) {
    %c0_i32 = arith.constant 0 : i32
    %c0_i32_0 = arith.constant 0 : i32
    return %arg0, %c0_i32 : i32, i32
  }
}

</mosaic_0001>

<llo_original>
// kernel: tpu_custom_call.1
$region0: #{tpu_custom_call.1}
  #allocation0 [shape = 'u32[]', space=smem, size = 0x4, offset = 0x4, fixed_abs, tag = 'smem constant byte address 0x4 - core index']
  #allocation1 [shape = 'u32[144,128]{1,0:T(1,128)}', space=vmem, size = 0x12000, scoped, tag = 'internal scratch']
  %s0 = inlined_call_operand.hbm [shape: f32[72,128], index: 0, kind: input, shape index: {}]
  %s1 = inlined_call_operand.hbm [shape: f32[128,384], index: 1, kind: input, shape index: {}]
  %s2 = inlined_call_operand.vmem [shape: f32[1,384], index: 2, kind: input, shape index: {}]
  %s3 = inlined_call_operand.hbm [shape: f32[72,384], index: 3, kind: output, shape index: {}]
  %s4 = sld [smem:[#allocation0]]
  $region30: #{tpu_custom_call.1} parent=0
    _
  %s6 = ssub.s32 1, %s4
  %s7 = scalar_select 0, %s6, %s4
  $region1: #{tpu_custom_call.1} parent=0
    #allocation2 [shape = 'u8[36864]{0}', space=vmem, size = 0x9000, scoped, tag = 'input window, operand 0, single buffered']
    #allocation3 [shape = 's32[1]{0}', space=sflag, size = 0x4, scoped, tag = 'scoped memory for tpu_custom_call.1']
    #allocation4 [shape = 's32[1]{0}', space=sflag, size = 0x4, scoped, tag = 'scoped memory for tpu_custom_call.1']
    #allocation5 [shape = 'u8[196608]{0}', space=vmem, size = 0x30000, scoped, tag = 'input window, operand 1, single buffered']
    #allocation6 [shape = 's32[1]{0}', space=sflag, size = 0x4, scoped, tag = 'scoped memory for tpu_custom_call.1']
    #allocation7 [shape = 'u8[110592]{0}', space=vmem, size = 0x1b000, scoped, tag = 'output window, operand 0, single buffered']
    %8 = vsyncpa [#allocation3], 0
    %9 = vsyncpa [#allocation6], 0
    %10 = vsyncpa [#allocation4], 0
    // Predicated region
    $region2: #{tpu_custom_call.1} parent=1 // pred_check
      _
    $region3: #{tpu_custom_call.1} parent=1 // pred_check_branch
      %12 = sbr.rel (0) target = $region5
    $region4: #{tpu_custom_call.1} parent=1 // pred_region
      %s14 = ssub.s32 1152, 1152
      %15 = vsyncadd [#allocation3], %s14
      %s16 = sshll.u32 [#allocation2], 4
      %s17 = int_to_ptr.vmem [resolvable:$true] %s16
      %22 = dma.hbm_to_vmem [thread:$0]  %s0, 1152, %s17, [#allocation3], 128, 128, 8
    $region5: #{tpu_custom_call.1} parent=1 // pred_fallthru
      _
    // Predicated region
    $region6: #{tpu_custom_call.1} parent=1 // pred_check
      _
    $region7: #{tpu_custom_call.1} parent=1 // pred_check_branch
      %24 = sbr.rel (0) target = $region9
    $region8: #{tpu_custom_call.1} parent=1 // pred_region
      %s26 = ssub.s32 6144, 6144
      %27 = vsyncadd [#allocation6], %s26
      %s28 = sshll.u32 [#allocation5], 4
      %s29 = int_to_ptr.vmem [resolvable:$true] %s28
      %34 = dma.hbm_to_vmem [thread:$0]  %s1, 6144, %s29, [#allocation6], 384, 384, 24
    $region9: #{tpu_custom_call.1} parent=1 // pred_fallthru
      _
    // Predicated region
    $region10: #{tpu_custom_call.1} parent=1 // pred_check
      _
    $region11: #{tpu_custom_call.1} parent=1 // pred_check_branch
      %36 = sbr.rel (0) target = $region13
    $region12: #{tpu_custom_call.1} parent=1 // pred_region
      _
    $region13: #{tpu_custom_call.1} parent=1 // pred_fallthru
      _
    // Predicated region
    $region14: #{tpu_custom_call.1} parent=1 // pred_check
      _
    $region15: #{tpu_custom_call.1} parent=1 // pred_check_branch
      %38 = sbr.rel (0) target = $region17
    $region16: #{tpu_custom_call.1} parent=1 // pred_region
      %39 = dma.done [#allocation3], 1152
    $region17: #{tpu_custom_call.1} parent=1 // pred_fallthru
      _
    // Predicated region
    $region18: #{tpu_custom_call.1} parent=1 // pred_check
      _
    $region19: #{tpu_custom_call.1} parent=1 // pred_check_branch
      %41 = sbr.rel (0) target = $region21
    $region20: #{tpu_custom_call.1} parent=1 // pred_region
      %42 = dma.done [#allocation6], 6144
    $region21: #{tpu_custom_call.1} parent=1 // pred_fallthru
      _
    %v43 = vld [vmem:[#allocation2] sm:$0xff]
    %v44 = vld [vmem:[#allocation2 + $0x8] sm:$0xff]
    %v45 = vld [vmem:[#allocation2 + $0x10] sm:$0xff]
    %v46 = vld [vmem:[#allocation2 + $0x18] sm:$0xff]
    %v47 = vld [vmem:[#allocation2 + $0x20] sm:$0xff]
    %v48 = vld [vmem:[#allocation2 + $0x28] sm:$0xff]
    %v49 = vld [vmem:[#allocation2 + $0x30] sm:$0xff]
    %v50 = vld [vmem:[#allocation2 + $0x38] sm:$0xff]
    %v51 = vld [vmem:[#allocation2 + $0x40] sm:$0xff]
    %v52 = vld [vmem:[#allocation5] sm:$0xff]
    %v53 = vld [vmem:[#allocation5 + $0x8] sm:$0xff]
    %v54 = vld [vmem:[#allocation5 + $0x10] sm:$0xff]
    %v55 = vld [vmem:[#allocation5 + $0x18] sm:$0xff]
    %v56 = vld [vmem:[#allocation5 + $0x20] sm:$0xff]
    %v57 = vld [vmem:[#allocation5 + $0x28] sm:$0xff]
    %v58 = vld [vmem:[#allocation5 + $0x30] sm:$0xff]
    %v59 = vld [vmem:[#allocation5 + $0x38] sm:$0xff]
    %v60 = vld [vmem:[#allocation5 + $0x40] sm:$0xff]
    %v61 = vld [vmem:[#allocation5 + $0x48] sm:$0xff]
    %v62 = vld [vmem:[#allocation5 + $0x50] sm:$0xff]
    %v63 = vld [vmem:[#allocation5 + $0x58] sm:$0xff]
    %v64 = vld [vmem:[#allocation5 + $0x60] sm:$0xff]
    %v65 = vld [vmem:[#allocation5 + $0x68] sm:$0xff]
    %v66 = vld [vmem:[#allocation5 + $0x70] sm:$0xff]
    %v67 = vld [vmem:[#allocation5 + $0x78] sm:$0xff]
    %v68 = vld [vmem:[#allocation5 + $0x80] sm:$0xff]
    %v69 = vld [vmem:[#allocation5 + $0x88] sm:$0xff]
    %v70 = vld [vmem:[#allocation5 + $0x90] sm:$0xff]
    %v71 = vld [vmem:[#allocation5 + $0x98] sm:$0xff]
    %v72 = vld [vmem:[#allocation5 + $0xa0] sm:$0xff]
    %v73 = vld [vmem:[#allocation5 + $0xa8] sm:$0xff]
    %v74 = vld [vmem:[#allocation5 + $0xb0] sm:$0xff]
    %v75 = vld [vmem:[#allocation5 + $0xb8] sm:$0xff]
    %v76 = vld [vmem:[#allocation5 + $0xc0] sm:$0xff]
    %v77 = vld [vmem:[#allocation5 + $0xc8] sm:$0xff]
    %v78 = vld [vmem:[#allocation5 + $0xd0] sm:$0xff]
    %v79 = vld [vmem:[#allocation5 + $0xd8] sm:$0xff]
    %v80 = vld [vmem:[#allocation5 + $0xe0] sm:$0xff]
    %v81 = vld [vmem:[#allocation5 + $0xe8] sm:$0xff]
    %v82 = vld [vmem:[#allocation5 + $0xf0] sm:$0xff]
    %v83 = vld [vmem:[#allocation5 + $0xf8] sm:$0xff]
    %v84 = vld [vmem:[#allocation5 + $0x100] sm:$0xff]
    %v85 = vld [vmem:[#allocation5 + $0x108] sm:$0xff]
    %v86 = vld [vmem:[#allocation5 + $0x110] sm:$0xff]
    %v87 = vld [vmem:[#allocation5 + $0x118] sm:$0xff]
    %v88 = vld [vmem:[#allocation5 + $0x120] sm:$0xff]
    %v89 = vld [vmem:[#allocation5 + $0x128] sm:$0xff]
    %v90 = vld [vmem:[#allocation5 + $0x130] sm:$0xff]
    %v91 = vld [vmem:[#allocation5 + $0x138] sm:$0xff]
    %v92 = vld [vmem:[#allocation5 + $0x140] sm:$0xff]
    %v93 = vld [vmem:[#allocation5 + $0x148] sm:$0xff]
    %v94 = vld [vmem:[#allocation5 + $0x150] sm:$0xff]
    %v95 = vld [vmem:[#allocation5 + $0x158] sm:$0xff]
    %v96 = vld [vmem:[#allocation5 + $0x160] sm:$0xff]
    %v97 = vld [vmem:[#allocation5 + $0x168] sm:$0xff]
    %v98 = vld [vmem:[#allocation5 + $0x170] sm:$0xff]
    %v99 = vld [vmem:[#allocation5 + $0x178] sm:$0xff]
    %v100 = vld [vmem:[%s2] sm:$0x7]
    %v102 = vlaneseq
    %v103 = vshrl.u32 %v102, 7
    %v104 = vsub.s32 0, %v103
    %v105 = vrot.slane %v100, %v104
    %v106 = vlaneseq
    %v107 = vshrl.u32 %v106, 7
    %v108 = vsub.s32 1, %v107
    %v109 = vrot.slane %v100, %v108
    %v110 = vlaneseq
    %v111 = vshrl.u32 %v110, 7
    %v112 = vsub.s32 2, %v111
    %v113 = vrot.slane %v100, %v112
    %117 = vmatprep.subr.mxu0 %v53
    %118 = vmatpush1.msra.mxu0 %v52
    %119 = vmatprep.subr.mxu0 %v56
    %120 = vmatpush1.msra.mxu0 %v55
    %121 = vmatprep.subr.mxu0 %v59
    %122 = vmatpush1.msra.mxu0 %v58
    %123 = vmatprep.subr.mxu0 %v62
    %124 = vmatpush1.msra.mxu0 %v61
    %125 = vmatprep.subr.mxu0 %v65
    %126 = vmatpush1.msra.mxu0 %v64
    %127 = vmatprep.subr.mxu0 %v68
    %128 = vmatpush1.msra.mxu0 %v67
    %129 = vmatprep.subr.mxu0 %v71
    %130 = vmatpush1.msra.mxu0 %v70
    %131 = vmatprep.subr.mxu0 %v74
    %132 = vmatpush1.msra.mxu0 %v73
    %133 = vmatprep.subr.mxu0 %v77
    %134 = vmatpush1.msra.mxu0 %v76
    %135 = vmatprep.subr.mxu0 %v80
    %136 = vmatpush1.msra.mxu0 %v79
    %137 = vmatprep.subr.mxu0 %v83
    %138 = vmatpush1.msra.mxu0 %v82
    %139 = vmatprep.subr.mxu0 %v86
    %140 = vmatpush1.msra.mxu0 %v85
    %141 = vmatprep.subr.mxu0 %v89
    %142 = vmatpush1.msra.mxu0 %v88
    %143 = vmatprep.subr.mxu0 %v92
    %144 = vmatpush1.msra.mxu0 %v91
    %145 = vmatprep.subr.mxu0 %v95
    %146 = vmatpush1.msra.mxu0 %v94
    %147 = vmatprep.subr.mxu0 %v98
    %148 = vmatpush1.msra.mxu0 %v97
    %149 = vmatprep.subr.mxu0 0.0
    %150 = vmatpush1.msra.mxu0 0.0
    %151 = vmatprep.subr.mxu0 0.0
    %152 = vmatpush1.msra.mxu0 0.0
    %153 = vmatprep.subr.mxu0 0.0
    %154 = vmatpush1.msra.mxu0 0.0
    %155 = vmatprep.subr.mxu0 0.0
    %156 = vmatpush1.msra.mxu0 0.0
    %157 = vmatprep.subr.mxu0 0.0
    %158 = vmatpush1.msra.mxu0 0.0
    %159 = vmatprep.subr.mxu0 0.0
    %160 = vmatpush1.msra.mxu0 0.0
    %161 = vmatprep.subr.mxu0 0.0
    %162 = vmatpush1.msra.mxu0 0.0
    %163 = vmatprep.subr.mxu0 0.0
    %164 = vmatpush1.msra.mxu0 0.0
    %165 = vmatprep.subr.mxu0 0.0
    %166 = vmatpush1.msra.mxu0 0.0
    %167 = vmatprep.subr.mxu0 0.0
    %168 = vmatpush1.msra.mxu0 0.0
    %169 = vmatprep.subr.mxu0 0.0
    %170 = vmatpush1.msra.mxu0 0.0
    %171 = vmatprep.subr.mxu0 0.0
    %172 = vmatpush1.msra.mxu0 0.0
    %173 = vmatprep.subr.mxu0 0.0
    %174 = vmatpush1.msra.mxu0 0.0
    %175 = vmatprep.subr.mxu0 0.0
    %176 = vmatpush1.msra.mxu0 0.0
    %177 = vmatprep.subr.mxu0 0.0
    %178 = vmatpush1.msra.mxu0 0.0
    %179 = vmatprep.subr.mxu0 0.0
    %180 = vmatpush1.msra.mxu0 0.0
    %181 = vmatprep.mubr.f32.mxu0 0.0
    %182 = vmatmul.mubr.f32.gmra.mrb[0].mxu0 %v43
    %v183 = vpop.f32.mrb[0].mxu0
    %v184 = vadd.f32 %v105, %v183
    %v185 = vpop.f32.mrb[0].mxu0
    %v186 = vadd.f32 %v109, %v185
    %187 = vmatprep.mubr.f32.mxu0 0.0
    %188 = vmatmul.mubr.f32.gmra.mrb[0].mxu0 %v44
    %v189 = vpop.f32.mrb[0].mxu0
    %v190 = vadd.f32 %v105, %v189
    %v191 = vpop.f32.mrb[0].mxu0
    %v192 = vadd.f32 %v109, %v191
    %193 = vmatprep.mubr.f32.mxu0 0.0
    %194 = vmatmul.mubr.f32.gmra.mrb[0].mxu0 %v45
    %v195 = vpop.f32.mrb[0].mxu0
    %v196 = vadd.f32 %v105, %v195
    %v197 = vpop.f32.mrb[0].mxu0
    %v198 = vadd.f32 %v109, %v197
    %199 = vmatprep.mubr.f32.mxu0 0.0
    %200 = vmatmul.mubr.f32.gmra.mrb[0].mxu0 %v46
    %v201 = vpop.f32.mrb[0].mxu0
    %v202 = vadd.f32 %v105, %v201
    %v203 = vpop.f32.mrb[0].mxu0
    %v204 = vadd.f32 %v109, %v203
    %205 = vmatprep.mubr.f32.mxu0 0.0
    %206 = vmatmul.mubr.f32.gmra.mrb[0].mxu0 %v47
    %v207 = vpop.f32.mrb[0].mxu0
    %v208 = vadd.f32 %v105, %v207
    %v209 = vpop.f32.mrb[0].mxu0
    %v210 = vadd.f32 %v109, %v209
    %211 = vmatprep.mubr.f32.mxu0 0.0
    %212 = vmatmul.mubr.f32.gmra.mrb[0].mxu0 %v48
    %v213 = vpop.f32.mrb[0].mxu0
    %v214 = vadd.f32 %v105, %v213
    %v215 = vpop.f32.mrb[0].mxu0
    %v216 = vadd.f32 %v109, %v215
    %217 = vmatprep.mubr.f32.mxu0 0.0
    %218 = vmatmul.mubr.f32.gmra.mrb[0].mxu0 %v49
    %v219 = vpop.f32.mrb[0].mxu0
    %v220 = vadd.f32 %v105, %v219
    %v221 = vpop.f32.mrb[0].mxu0
    %v222 = vadd.f32 %v109, %v221
    %223 = vmatprep.mubr.f32.mxu0 0.0
    %224 = vmatmul.mubr.f32.gmra.mrb[0].mxu0 %v50
    %v225 = vpop.f32.mrb[0].mxu0
    %v226 = vadd.f32 %v105, %v225
    %v227 = vpop.f32.mrb[0].mxu0
    %v228 = vadd.f32 %v109, %v227
    %229 = vmatprep.mubr.f32.mxu0 0.0
    %230 = vmatmul.mubr.f32.gmra.mrb[0].mxu0 %v51
    %v231 = vpop.f32.mrb[0].mxu0
    %v232 = vadd.f32 %v105, %v231
    %v233 = vpop.f32.mrb[0].mxu0
    %v234 = vadd.f32 %v109, %v233
    %235 = vdwg.mxu0
    %236 = vmatprep.subr.mxu0 0.0
    %237 = vmatpush1.msra.mxu0 %v54
    %238 = vmatprep.subr.mxu0 0.0
    %239 = vmatpush1.msra.mxu0 %v57
    %240 = vmatprep.subr.mxu0 0.0
    %241 = vmatpush1.msra.mxu0 %v60
    %242 = vmatprep.subr.mxu0 0.0
    %243 = vmatpush1.msra.mxu0 %v63
    %244 = vmatprep.subr.mxu0 0.0
    %245 = vmatpush1.msra.mxu0 %v66
    %246 = vmatprep.subr.mxu0 0.0
    %247 = vmatpush1.msra.mxu0 %v69
    %248 = vmatprep.subr.mxu0 0.0
    %249 = vmatpush1.msra.mxu0 %v72
    %250 = vmatprep.subr.mxu0 0.0
    %251 = vmatpush1.msra.mxu0 %v75
    %252 = vmatprep.subr.mxu0 0.0
    %253 = vmatpush1.msra.mxu0 %v78
    %254 = vmatprep.subr.mxu0 0.0
    %255 = vmatpush1.msra.mxu0 %v81
    %256 = vmatprep.subr.mxu0 0.0
    %257 = vmatpush1.msra.mxu0 %v84
    %258 = vmatprep.subr.mxu0 0.0
    %259 = vmatpush1.msra.mxu0 %v87
    %260 = vmatprep.subr.mxu0 0.0
    %261 = vmatpush1.msra.mxu0 %v90
    %262 = vmatprep.subr.mxu0 0.0
    %263 = vmatpush1.msra.mxu0 %v93
    %264 = vmatprep.subr.mxu0 0.0
    %265 = vmatpush1.msra.mxu0 %v96
    %266 = vmatprep.subr.mxu0 0.0
    %267 = vmatpush1.msra.mxu0 %v99
    %268 = vmatprep.subr.mxu0 0.0
    %269 = vmatpush1.msra.mxu0 0.0
    %270 = vmatprep.subr.mxu0 0.0
    %271 = vmatpush1.msra.mxu0 0.0
    %272 = vmatprep.subr.mxu0 0.0
    %273 = vmatpush1.msra.mxu0 0.0
    %274 = vmatprep.subr.mxu0 0.0
    %275 = vmatpush1.msra.mxu0 0.0
    %276 = vmatprep.subr.mxu0 0.0
    %277 = vmatpush1.msra.mxu0 0.0
    %278 = vmatprep.subr.mxu0 0.0
    %279 = vmatpush1.msra.mxu0 0.0
    %280 = vmatprep.subr.mxu0 0.0
    %281 = vmatpush1.msra.mxu0 0.0
    %282 = vmatprep.subr.mxu0 0.0
    %283 = vmatpush1.msra.mxu0 0.0
    %284 = vmatprep.subr.mxu0 0.0
    %285 = vmatpush1.msra.mxu0 0.0
    %286 = vmatprep.subr.mxu0 0.0
    %287 = vmatpush1.msra.mxu0 0.0
    %288 = vmatprep.subr.mxu0 0.0
    %289 = vmatpush1.msra.mxu0 0.0
    %290 = vmatprep.subr.mxu0 0.0
    %291 = vmatpush1.msra.mxu0 0.0
    %292 = vmatprep.subr.mxu0 0.0
    %293 = vmatpush1.msra.mxu0 0.0
    %294 = vmatprep.subr.mxu0 0.0
    %295 = vmatpush1.msra.mxu0 0.0
    %296 = vmatprep.subr.mxu0 0.0
    %297 = vmatpush1.msra.mxu0 0.0
    %298 = vmatprep.subr.mxu0 0.0
    %299 = vmatpush1.msra.mxu0 0.0
    %300 = vmatprep.mubr.f32.mxu0 0.0
    %301 = vmatmul.mubr.f32.gmra.mrb[0].mxu0 %v43
    %v302 = vpop.f32.mrb[0].mxu0
    %v303 = vadd.f32 %v113, %v302
    %v304 = vpop.f32.mrb[0].mxu0
    %305 = vmatprep.mubr.f32.mxu0 0.0
    %306 = vmatmul.mubr.f32.gmra.mrb[0].mxu0 %v44
    %v307 = vpop.f32.mrb[0].mxu0
    %v308 = vadd.f32 %v113, %v307
    %v309 = vpop.f32.mrb[0].mxu0
    %310 = vmatprep.mubr.f32.mxu0 0.0
    %311 = vmatmul.mubr.f32.gmra.mrb[0].mxu0 %v45
    %v312 = vpop.f32.mrb[0].mxu0
    %v313 = vadd.f32 %v113, %v312
    %v314 = vpop.f32.mrb[0].mxu0
    %315 = vmatprep.mubr.f32.mxu0 0.0
    %316 = vmatmul.mubr.f32.gmra.mrb[0].mxu0 %v46
    %v317 = vpop.f32.mrb[0].mxu0
    %v318 = vadd.f32 %v113, %v317
    %v319 = vpop.f32.mrb[0].mxu0
    %320 = vmatprep.mubr.f32.mxu0 0.0
    %321 = vmatmul.mubr.f32.gmra.mrb[0].mxu0 %v47
    %v322 = vpop.f32.mrb[0].mxu0
    %v323 = vadd.f32 %v113, %v322
    %v324 = vpop.f32.mrb[0].mxu0
    %325 = vmatprep.mubr.f32.mxu0 0.0
    %326 = vmatmul.mubr.f32.gmra.mrb[0].mxu0 %v48
    %v327 = vpop.f32.mrb[0].mxu0
    %v328 = vadd.f32 %v113, %v327
    %v329 = vpop.f32.mrb[0].mxu0
    %330 = vmatprep.mubr.f32.mxu0 0.0
    %331 = vmatmul.mubr.f32.gmra.mrb[0].mxu0 %v49
    %v332 = vpop.f32.mrb[0].mxu0
    %v333 = vadd.f32 %v113, %v332
    %v334 = vpop.f32.mrb[0].mxu0
    %335 = vmatprep.mubr.f32.mxu0 0.0
    %336 = vmatmul.mubr.f32.gmra.mrb[0].mxu0 %v50
    %v337 = vpop.f32.mrb[0].mxu0
    %v338 = vadd.f32 %v113, %v337
    %v339 = vpop.f32.mrb[0].mxu0
    %340 = vmatprep.mubr.f32.mxu0 0.0
    %341 = vmatmul.mubr.f32.gmra.mrb[0].mxu0 %v51
    %v342 = vpop.f32.mrb[0].mxu0
    %v343 = vadd.f32 %v113, %v342
    %v344 = vpop.f32.mrb[0].mxu0
    %345 = vdwg.mxu0
    %346 = vst [vmem:[#allocation7] sm:$0xff] %v184
    %347 = vst [vmem:[#allocation7 + $0x8] sm:$0xff] %v186
    %348 = vst [vmem:[#allocation7 + $0x10] sm:$0xff] %v303
    %349 = vst [vmem:[#allocation7 + $0x18] sm:$0xff] %v190
    %350 = vst [vmem:[#allocation7 + $0x20] sm:$0xff] %v192
    %351 = vst [vmem:[#allocation7 + $0x28] sm:$0xff] %v308
    %352 = vst [vmem:[#allocation7 + $0x30] sm:$0xff] %v196
    %353 = vst [vmem:[#allocation7 + $0x38] sm:$0xff] %v198
    %354 = vst [vmem:[#allocation7 + $0x40] sm:$0xff] %v313
    %355 = vst [vmem:[#allocation7 + $0x48] sm:$0xff] %v202
    %356 = vst [vmem:[#allocation7 + $0x50] sm:$0xff] %v204
    %357 = vst [vmem:[#allocation7 + $0x58] sm:$0xff] %v318
    %358 = vst [vmem:[#allocation7 + $0x60] sm:$0xff] %v208
    %359 = vst [vmem:[#allocation7 + $0x68] sm:$0xff] %v210
    %360 = vst [vmem:[#allocation7 + $0x70] sm:$0xff] %v323
    %361 = vst [vmem:[#allocation7 + $0x78] sm:$0xff] %v214
    %362 = vst [vmem:[#allocation7 + $0x80] sm:$0xff] %v216
    %363 = vst [vmem:[#allocation7 + $0x88] sm:$0xff] %v328
    %364 = vst [vmem:[#allocation7 + $0x90] sm:$0xff] %v220
    %365 = vst [vmem:[#allocation7 + $0x98] sm:$0xff] %v222
    %366 = vst [vmem:[#allocation7 + $0xa0] sm:$0xff] %v333
    %367 = vst [vmem:[#allocation7 + $0xa8] sm:$0xff] %v226
    %368 = vst [vmem:[#allocation7 + $0xb0] sm:$0xff] %v228
    %369 = vst [vmem:[#allocation7 + $0xb8] sm:$0xff] %v338
    %370 = vst [vmem:[#allocation7 + $0xc0] sm:$0xff] %v232
    %371 = vst [vmem:[#allocation7 + $0xc8] sm:$0xff] %v234
    %372 = vst [vmem:[#allocation7 + $0xd0] sm:$0xff] %v343
    // Predicated region
    $region22: #{tpu_custom_call.1} parent=1 // pred_check
      _
    $region23: #{tpu_custom_call.1} parent=1 // pred_check_branch
      %374 = sbr.rel (0) target = $region25
    $region24: #{tpu_custom_call.1} parent=1 // pred_region
      %s376 = ssub.s32 3456, 3456
      %377 = vsyncadd [#allocation4], %s376
      %s378 = sshll.u32 [#allocation7], 4
      %s379 = int_to_ptr.vmem [resolvable:$true] %s378
      %384 = dma.vmem_to_hbm [thread:$0]  %s379, 3456, %s3, [#allocation4], 384, 384, 24
    $region25: #{tpu_custom_call.1} parent=1 // pred_fallthru
      _
    // Predicated region
    $region26: #{tpu_custom_call.1} parent=1 // pred_check
      _
    $region27: #{tpu_custom_call.1} parent=1 // pred_check_branch
      %386 = sbr.rel (0) target = $region29
    $region28: #{tpu_custom_call.1} parent=1 // pred_region
      %387 = dma.done [#allocation4], 3456
    $region29: #{tpu_custom_call.1} parent=1 // pred_fallthru
      _
    %388 = vsyncpa [#allocation3], 1
    %389 = vsyncpa [#allocation6], 1
    %390 = vsyncpa [#allocation4], 1

</llo_original>
